<compile_context>
chip_gen: v7x
topology: tpu7x:2x2x1
jax: 0.10.0
libtpu: 0.0.40
codegen_flags: <defaults>
</compile_context>

<pallas_src>
import functools

import numpy as np
import jax
import jax.numpy as jnp
from jax.experimental import pallas as pl
from jax.experimental.pallas import tpu as pltpu


def _round_up(n: int, m: int) -> int:
    return ((n + m - 1) // m) * m


def mlp_kernel(x_ref, w1_ref, b1_ref, w2_ref, b2_ref, w3_ref, b3_ref, o_ref,
               *, use_bf16_matmul: bool):
    # x_ref: (F, TB) -- features on sublanes, batch tile on lanes.
    xT = x_ref[...]
    w1 = w1_ref[...]                      # (H1, F), torch [out, in] layout
    n_feat = xT.shape[0]

    # --- fc1 on the VPU: K = n_feat (=6) is far too small to feed the MXU
    # (<1% of a pass); 6 broadcast FMAs use otherwise-idle VALU slots and
    # skip an MXU push/pop round trip per grid step.
    h1 = w1[:, 0:1] * xT[0:1, :]          # (H1, 1) * (1, TB) -> (H1, TB)
    for k in range(1, n_feat):            # static unroll, n_feat is tiny
        h1 = h1 + w1[:, k:k + 1] * xT[k:k + 1, :]
    h1 = h1 + b1_ref[...]                 # (H1, 1) broadcast over lanes
    h1 = jnp.where(h1 > 0, h1, 0.01 * h1)

    # --- fc2 on the MXU: (H2, H1) @ (H1, TB), f32 accumulation.
    w2 = w2_ref[...]
    if use_bf16_matmul:                   # large-batch fast path on v6e/v7x
        w2 = w2.astype(jnp.bfloat16)
        h1 = h1.astype(jnp.bfloat16)
    h2 = jnp.dot(w2, h1, preferred_element_type=jnp.float32)
    h2 = h2 + b2_ref[...]
    h2 = jnp.where(h2 > 0, h2, 0.01 * h2)

    # --- fc3 (out_features = 1) off the MXU: VPU multiply + cross-sublane
    # reduce gives a lane-dense (1, TB) result directly; b3 is an SMEM scalar.
    y = jnp.sum(w3_ref[...] * h2, axis=0, keepdims=True) + b3_ref[0, 0]
    o_ref[...] = y.astype(o_ref.dtype)


def neural_net_forward(x, params, *, block_b: int = 512,
                       use_bf16_matmul: bool = False):
    """Forward pass.  x: (B, F) float32.  params (torch layout):
      w1 (64, F), b1 (64, 1), w2 (128, 64), b2 (128, 1), w3 (128, 1), b3 (1, 1)
    Returns (B, 1) float32, matching the PyTorch module.
    """
    w1, b1, w2, b2, w3, b3 = params
    B, F = x.shape
    n_h1, n_h2 = w1.shape[0], w2.shape[0]

    # Batch tile: lane multiple, capped at block_b.  (Sweep 512..2048 on
    # v5e/v6e; 512 also fits comfortably inside v7x's 32 MiB scoped VMEM
    # with the ~35 KiB of resident weights and double-buffered x/out tiles.)
    tb = min(block_b, _round_up(B, 128))
    b_pad = _round_up(B, tb)

    # Batch on lanes: transpose and zero-pad the lane (batch) dimension.
    xT = jnp.pad(x.T, ((0, 0), (0, b_pad - B)))

    resident = lambda i: (0, 0)           # weights/biases stay put in VMEM

    out = pl.pallas_call(
        functools.partial(mlp_kernel, use_bf16_matmul=use_bf16_matmul),
        out_shape=jax.ShapeDtypeStruct((1, b_pad), jnp.float32),
        grid=(pl.cdiv(b_pad, tb),),
        in_specs=[
            pl.BlockSpec((F, tb), lambda i: (0, i)),        # x tile (pipelined)
            pl.BlockSpec((n_h1, F), resident),              # w1
            pl.BlockSpec((n_h1, 1), resident),              # b1
            pl.BlockSpec((n_h2, n_h1), resident),           # w2
            pl.BlockSpec((n_h2, 1), resident),              # b2
            pl.BlockSpec((n_h2, 1), resident),              # w3 (= fc3.weight.T)
            pl.BlockSpec((1, 1), resident,                  # b3 scalar in SMEM
                         memory_space=pltpu.MemorySpace.SMEM),
        ],
        out_specs=pl.BlockSpec((1, tb), lambda i: (0, i)),  # lane-dense output
        compiler_params=pltpu.CompilerParams(
            dimension_semantics=("parallel",),              # megacore on v7x
        ),
    )(xT, w1, b1, w2, b2, w3, b3)

    return out[:, :B].T                   # (B, 1)


def make_params():
    """Deterministic params matching the PyTorch module's shapes, kept in the
    torch [out, in] layout.  fc1 weights come from a DFT, mirroring the
    dft_weights copy in NeuralNet.__init__ (synthetic, built in-script)."""
    input_size, n_h1, n_h2, n_out = 6, 64, 128, 1

    t = np.linspace(0.0, 1.0, input_size * n_h1, dtype=np.float32)
    dft = np.fft.fft(np.sin(2.0 * np.pi * 3.0 * t))
    w1 = jnp.asarray(np.real(dft).astype(np.float32).reshape(n_h1, input_size))

    key = jax.random.PRNGKey(0)
    k = jax.random.split(key, 5)

    def uniform_like_torch(kk, shape, fan_in):
        bound = 1.0 / np.sqrt(fan_in)
        return jax.random.uniform(kk, shape, jnp.float32, -bound, bound)

    b1 = uniform_like_torch(k[0], (n_h1, 1), input_size)
    w2 = uniform_like_torch(k[1], (n_h2, n_h1), n_h1)
    b2 = uniform_like_torch(k[2], (n_h2, 1), n_h1)
    w3 = uniform_like_torch(k[3], (n_h2, n_out), n_h2)   # fc3.weight.T
    b3 = uniform_like_torch(k[4], (1, 1), n_h2)
    return (w1, b1, w2, b2, w3, b3)


if __name__ == "__main__":
    # Same synthetic data as the PyTorch script: shape [2, 6], normalized by 99.
    data = np.array([[95, 83, 75, 45, 86, 1],
                     [85, 83, 70, 45, 86, 0]], dtype=np.float32)
    x = jnp.asarray(data / 99.0, dtype=jnp.float32)

    params = make_params()
    out = neural_net_forward(x, params)
    jax.block_until_ready(out)

    # Pure-JAX reference (torch semantics: y = x @ W.T + b).
    w1, b1, w2, b2, w3, b3 = params
    r = x @ w1.T + b1[:, 0]
    r = jnp.where(r > 0, r, 0.01 * r)
    r = r @ w2.T + b2[:, 0]
    r = jnp.where(r > 0, r, 0.01 * r)
    ref = r @ w3 + b3[0, 0]

    np.testing.assert_allclose(np.asarray(out), np.asarray(ref),
                               rtol=1e-4, atol=1e-3)
    assert out.shape == (2, 1)
    print("KERNEL_OK")
</pallas_src>

<mosaic_0001>
module attributes {stable_mosaic.version = 11 : i64} {
  func.func @mlp_kernel(%arg0: i32, %arg1: memref<6x128xf32, #tpu.memory_space<vmem>>, %arg2: memref<64x6xf32, #tpu.memory_space<vmem>>, %arg3: memref<64x1xf32, #tpu.memory_space<vmem>>, %arg4: memref<128x64xf32, #tpu.memory_space<vmem>>, %arg5: memref<128x1xf32, #tpu.memory_space<vmem>>, %arg6: memref<128x1xf32, #tpu.memory_space<vmem>>, %arg7: memref<1x1xf32, #tpu.memory_space<smem>>, %arg8: memref<1x128xf32, #tpu.memory_space<vmem>>) attributes {dimension_semantics = [#tpu.dimension_semantics<parallel>], iteration_bounds = array<i64: 1>, scalar_prefetch = 0 : i64, scratch_operands = 0 : i64, tpu.core_type = #tpu.core_type<tc>, window_params = [{transform_indices = @transform_0, window_bounds = array<i64: 6, 128>}, {pipeline_mode = #tpu.pipeline_mode<synchronous>, transform_indices = @transform_1, window_bounds = array<i64: 64, 6>}, {pipeline_mode = #tpu.pipeline_mode<synchronous>, transform_indices = @transform_2, window_bounds = array<i64: 64, 1>}, {pipeline_mode = #tpu.pipeline_mode<synchronous>, transform_indices = @transform_3, window_bounds = array<i64: 128, 64>}, {pipeline_mode = #tpu.pipeline_mode<synchronous>, transform_indices = @transform_4, window_bounds = array<i64: 128, 1>}, {pipeline_mode = #tpu.pipeline_mode<synchronous>, transform_indices = @transform_5, window_bounds = array<i64: 128, 1>}, {transform_indices = @transform_6, window_bounds = array<i64: 1, 1>}, {transform_indices = @transform_7, window_bounds = array<i64: 1, 128>}]} {
    %c0 = arith.constant 0 : index
    %c0_0 = arith.constant 0 : index
    %0 = vector.load %arg1[%c0, %c0_0] : memref<6x128xf32, #tpu.memory_space<vmem>>, vector<6x128xf32>
    %c0_1 = arith.constant 0 : index
    %c0_2 = arith.constant 0 : index
    %1 = vector.load %arg2[%c0_1, %c0_2] : memref<64x6xf32, #tpu.memory_space<vmem>>, vector<64x6xf32>
    %2 = vector.extract_strided_slice %1 {offsets = [0, 0], sizes = [64, 1], strides = [1, 1]} : vector<64x6xf32> to vector<64x1xf32>
    %3 = vector.extract_strided_slice %0 {offsets = [0, 0], sizes = [1, 128], strides = [1, 1]} : vector<6x128xf32> to vector<1x128xf32>
    %4 = vector.broadcast %2 : vector<64x1xf32> to vector<64x128xf32>
    %5 = vector.broadcast %3 : vector<1x128xf32> to vector<64x128xf32>
    %6 = arith.mulf %4, %5 : vector<64x128xf32>
    %7 = vector.extract_strided_slice %1 {offsets = [0, 1], sizes = [64, 1], strides = [1, 1]} : vector<64x6xf32> to vector<64x1xf32>
    %8 = vector.extract_strided_slice %0 {offsets = [1, 0], sizes = [1, 128], strides = [1, 1]} : vector<6x128xf32> to vector<1x128xf32>
    %9 = vector.broadcast %7 : vector<64x1xf32> to vector<64x128xf32>
    %10 = vector.broadcast %8 : vector<1x128xf32> to vector<64x128xf32>
    %11 = arith.mulf %9, %10 : vector<64x128xf32>
    %12 = arith.addf %6, %11 : vector<64x128xf32>
    %13 = vector.extract_strided_slice %1 {offsets = [0, 2], sizes = [64, 1], strides = [1, 1]} : vector<64x6xf32> to vector<64x1xf32>
    %14 = vector.extract_strided_slice %0 {offsets = [2, 0], sizes = [1, 128], strides = [1, 1]} : vector<6x128xf32> to vector<1x128xf32>
    %15 = vector.broadcast %13 : vector<64x1xf32> to vector<64x128xf32>
    %16 = vector.broadcast %14 : vector<1x128xf32> to vector<64x128xf32>
    %17 = arith.mulf %15, %16 : vector<64x128xf32>
    %18 = arith.addf %12, %17 : vector<64x128xf32>
    %19 = vector.extract_strided_slice %1 {offsets = [0, 3], sizes = [64, 1], strides = [1, 1]} : vector<64x6xf32> to vector<64x1xf32>
    %20 = vector.extract_strided_slice %0 {offsets = [3, 0], sizes = [1, 128], strides = [1, 1]} : vector<6x128xf32> to vector<1x128xf32>
    %21 = vector.broadcast %19 : vector<64x1xf32> to vector<64x128xf32>
    %22 = vector.broadcast %20 : vector<1x128xf32> to vector<64x128xf32>
    %23 = arith.mulf %21, %22 : vector<64x128xf32>
    %24 = arith.addf %18, %23 : vector<64x128xf32>
    %25 = vector.extract_strided_slice %1 {offsets = [0, 4], sizes = [64, 1], strides = [1, 1]} : vector<64x6xf32> to vector<64x1xf32>
    %26 = vector.extract_strided_slice %0 {offsets = [4, 0], sizes = [1, 128], strides = [1, 1]} : vector<6x128xf32> to vector<1x128xf32>
    %27 = vector.broadcast %25 : vector<64x1xf32> to vector<64x128xf32>
    %28 = vector.broadcast %26 : vector<1x128xf32> to vector<64x128xf32>
    %29 = arith.mulf %27, %28 : vector<64x128xf32>
    %30 = arith.addf %24, %29 : vector<64x128xf32>
    %31 = vector.extract_strided_slice %1 {offsets = [0, 5], sizes = [64, 1], strides = [1, 1]} : vector<64x6xf32> to vector<64x1xf32>
    %32 = vector.extract_strided_slice %0 {offsets = [5, 0], sizes = [1, 128], strides = [1, 1]} : vector<6x128xf32> to vector<1x128xf32>
    %33 = vector.broadcast %31 : vector<64x1xf32> to vector<64x128xf32>
    %34 = vector.broadcast %32 : vector<1x128xf32> to vector<64x128xf32>
    %35 = arith.mulf %33, %34 : vector<64x128xf32>
    %36 = arith.addf %30, %35 : vector<64x128xf32>
    %c0_3 = arith.constant 0 : index
    %c0_4 = arith.constant 0 : index
    %37 = vector.load %arg3[%c0_3, %c0_4] : memref<64x1xf32, #tpu.memory_space<vmem>>, vector<64x1xf32>
    %38 = vector.broadcast %37 : vector<64x1xf32> to vector<64x128xf32>
    %39 = arith.addf %36, %38 : vector<64x128xf32>
    %cst = arith.constant 0.000000e+00 : f32
    %40 = vector.broadcast %cst : f32 to vector<64x128xf32>
    %41 = arith.cmpf ogt, %39, %40 : vector<64x128xf32>
    %cst_5 = arith.constant 0.00999999977 : f32
    %42 = vector.broadcast %cst_5 : f32 to vector<64x128xf32>
    %43 = arith.mulf %42, %39 : vector<64x128xf32>
    %44 = arith.select %41, %39, %43 : vector<64x128xi1>, vector<64x128xf32>
    %c0_6 = arith.constant 0 : index
    %c0_7 = arith.constant 0 : index
    %45 = vector.load %arg4[%c0_6, %c0_7] : memref<128x64xf32, #tpu.memory_space<vmem>>, vector<128x64xf32>
    %cst_8 = arith.constant dense<0.000000e+00> : vector<128x128xf32>
    %46 = tpu.matmul %45, %44, %cst_8 {dimension_numbers = #tpu.dot_dimension_numbers<[1], [0], [0], [1], [0, 0, 1, 1], [], []>} : vector<128x64xf32>, vector<64x128xf32>, vector<128x128xf32> -> vector<128x128xf32>
    %c0_9 = arith.constant 0 : index
    %c0_10 = arith.constant 0 : index
    %47 = vector.load %arg5[%c0_9, %c0_10] : memref<128x1xf32, #tpu.memory_space<vmem>>, vector<128x1xf32>
    %48 = vector.broadcast %47 : vector<128x1xf32> to vector<128x128xf32>
    %49 = arith.addf %46, %48 : vector<128x128xf32>
    %cst_11 = arith.constant 0.000000e+00 : f32
    %50 = vector.broadcast %cst_11 : f32 to vector<128x128xf32>
    %51 = arith.cmpf ogt, %49, %50 : vector<128x128xf32>
    %cst_12 = arith.constant 0.00999999977 : f32
    %52 = vector.broadcast %cst_12 : f32 to vector<128x128xf32>
    %53 = arith.mulf %52, %49 : vector<128x128xf32>
    %54 = arith.select %51, %49, %53 : vector<128x128xi1>, vector<128x128xf32>
    %c0_13 = arith.constant 0 : index
    %c0_14 = arith.constant 0 : index
    %55 = vector.load %arg6[%c0_13, %c0_14] : memref<128x1xf32, #tpu.memory_space<vmem>>, vector<128x1xf32>
    %56 = vector.broadcast %55 : vector<128x1xf32> to vector<128x128xf32>
    %57 = arith.mulf %56, %54 : vector<128x128xf32>
    %cst_15 = arith.constant dense<0.000000e+00> : vector<128xf32>
    %58 = vector.multi_reduction <add>, %57, %cst_15 [0] : vector<128x128xf32> to vector<128xf32>
    %59 = vector.shape_cast %58 : vector<128xf32> to vector<1x128xf32>
    %c0_16 = arith.constant 0 : index
    %c0_17 = arith.constant 0 : index
    %60 = memref.load %arg7[%c0_16, %c0_17] : memref<1x1xf32, #tpu.memory_space<smem>>
    %61 = vector.broadcast %60 : f32 to vector<1x128xf32>
    %62 = arith.addf %59, %61 : vector<1x128xf32>
    %c0_18 = arith.constant 0 : index
    %c0_19 = arith.constant 0 : index
    %63 = vector.load %arg8[%c0_18, %c0_19] : memref<1x128xf32, #tpu.memory_space<vmem>>, vector<1x128xf32>
    tpu.vector_store %arg8[%c0_18, %c0_19], %62 {strides = array<i32>} : memref<1x128xf32, #tpu.memory_space<vmem>>, vector<1x128xf32>,
    return
  }
  func.func @transform_0(%arg0: i32) -> (i32, i32) {
    %c0_i32 = arith.constant 0 : i32
    %c0_i32_0 = arith.constant 0 : i32
    return %c0_i32, %arg0 : i32, i32
  }
  func.func @transform_1(%arg0: i32) -> (i32, i32) {
    %c0_i32 = arith.constant 0 : i32
    %c0_i32_0 = arith.constant 0 : i32
    %c0_i32_1 = arith.constant 0 : i32
    return %c0_i32, %c0_i32_0 : i32, i32
  }
  func.func @transform_2(%arg0: i32) -> (i32, i32) {
    %c0_i32 = arith.constant 0 : i32
    %c0_i32_0 = arith.constant 0 : i32
    %c0_i32_1 = arith.constant 0 : i32
    return %c0_i32, %c0_i32_0 : i32, i32
  }
  func.func @transform_3(%arg0: i32) -> (i32, i32) {
    %c0_i32 = arith.constant 0 : i32
    %c0_i32_0 = arith.constant 0 : i32
    %c0_i32_1 = arith.constant 0 : i32
    return %c0_i32, %c0_i32_0 : i32, i32
  }
  func.func @transform_4(%arg0: i32) -> (i32, i32) {
    %c0_i32 = arith.constant 0 : i32
    %c0_i32_0 = arith.constant 0 : i32
    %c0_i32_1 = arith.constant 0 : i32
    return %c0_i32, %c0_i32_0 : i32, i32
  }
  func.func @transform_5(%arg0: i32) -> (i32, i32) {
    %c0_i32 = arith.constant 0 : i32
    %c0_i32_0 = arith.constant 0 : i32
    %c0_i32_1 = arith.constant 0 : i32
    return %c0_i32, %c0_i32_0 : i32, i32
  }
  func.func @transform_6(%arg0: i32) -> (i32, i32) {
    %c0_i32 = arith.constant 0 : i32
    %c0_i32_0 = arith.constant 0 : i32
    %c0_i32_1 = arith.constant 0 : i32
    return %c0_i32, %c0_i32_0 : i32, i32
  }
  func.func @transform_7(%arg0: i32) -> (i32, i32) {
    %c0_i32 = arith.constant 0 : i32
    %c0_i32_0 = arith.constant 0 : i32
    return %c0_i32, %arg0 : i32, i32
  }
}

</mosaic_0001>

<llo_original>
// kernel: tpu_custom_call.1
$region0: #{tpu_custom_call.1}
  #allocation0 [shape = 'u32[]', space=smem, size = 0x4, offset = 0x4, fixed_abs, tag = 'smem constant byte address 0x4 - core index']
  #allocation1 [shape = 'u32[144,128]{1,0:T(1,128)}', space=vmem, size = 0x12000, scoped, tag = 'internal scratch']
  #allocation2 [shape = 'f32[1,1]{1,0:T(1,128)S(6)}', space=smem, size = 0x200, scoped, tag = 'scoped memory for tpu_custom_call.1']
  %s0 = inlined_call_operand.vmem [shape: f32[6,128], index: 0, kind: input, shape index: {}]
  %s1 = inlined_call_operand.vmem [shape: f32[64,6], index: 1, kind: input, shape index: {}]
  %s2 = inlined_call_operand.vmem [shape: f32[64,1], index: 2, kind: input, shape index: {}]
  %s3 = inlined_call_operand.vmem [shape: f32[128,64], index: 3, kind: input, shape index: {}]
  %s4 = inlined_call_operand.vmem [shape: f32[128,1], index: 4, kind: input, shape index: {}]
  %s5 = inlined_call_operand.vmem [shape: f32[128,1], index: 5, kind: input, shape index: {}]
  %s6 = inlined_call_operand.<no memory space> [shape: f32[1,1], index: 6, kind: input, shape index: {}]
  %s7 = inlined_call_operand.hbm [shape: f32[1,128], index: 7, kind: output, shape index: {}]
  %s8 = sld [smem:[#allocation0]]
  $region38: #{tpu_custom_call.1} parent=0
    _
  %s10 = ssub.s32 1, %s8
  %s11 = scalar_select 0, %s10, %s8
  %12 = sst [smem:[#allocation2]] %s6
  $region1: #{tpu_custom_call.1} parent=0
    #allocation3 [shape = 'u8[512]{0}', space=vmem, size = 0x400, scoped, tag = 'output window, operand 0, single buffered']
    #allocation4 [shape = 's32[1]{0}', space=sflag, size = 0x4, scoped, tag = 'scoped memory for tpu_custom_call.1']
    %13 = vsyncpa [#allocation4], 0
    // Predicated region
    $region2: #{tpu_custom_call.1} parent=1 // pred_check
      _
    $region3: #{tpu_custom_call.1} parent=1 // pred_check_branch
      %15 = sbr.rel (0) target = $region5
    $region4: #{tpu_custom_call.1} parent=1 // pred_region
      _
    $region5: #{tpu_custom_call.1} parent=1 // pred_fallthru
      _
    // Predicated region
    $region6: #{tpu_custom_call.1} parent=1 // pred_check
      _
    $region7: #{tpu_custom_call.1} parent=1 // pred_check_branch
      %17 = sbr.rel (0) target = $region9
    $region8: #{tpu_custom_call.1} parent=1 // pred_region
      _
    $region9: #{tpu_custom_call.1} parent=1 // pred_fallthru
      _
    // Predicated region
    $region10: #{tpu_custom_call.1} parent=1 // pred_check
      _
    $region11: #{tpu_custom_call.1} parent=1 // pred_check_branch
      %19 = sbr.rel (0) target = $region13
    $region12: #{tpu_custom_call.1} parent=1 // pred_region
      _
    $region13: #{tpu_custom_call.1} parent=1 // pred_fallthru
      _
    // Predicated region
    $region14: #{tpu_custom_call.1} parent=1 // pred_check
      _
    $region15: #{tpu_custom_call.1} parent=1 // pred_check_branch
      %21 = sbr.rel (0) target = $region17
    $region16: #{tpu_custom_call.1} parent=1 // pred_region
      _
    $region17: #{tpu_custom_call.1} parent=1 // pred_fallthru
      _
    // Predicated region
    $region18: #{tpu_custom_call.1} parent=1 // pred_check
      _
    $region19: #{tpu_custom_call.1} parent=1 // pred_check_branch
      %23 = sbr.rel (0) target = $region21
    $region20: #{tpu_custom_call.1} parent=1 // pred_region
      _
    $region21: #{tpu_custom_call.1} parent=1 // pred_fallthru
      _
    // Predicated region
    $region22: #{tpu_custom_call.1} parent=1 // pred_check
      _
    $region23: #{tpu_custom_call.1} parent=1 // pred_check_branch
      %25 = sbr.rel (0) target = $region25
    $region24: #{tpu_custom_call.1} parent=1 // pred_region
      _
    $region25: #{tpu_custom_call.1} parent=1 // pred_fallthru
      _
    // Predicated region
    $region26: #{tpu_custom_call.1} parent=1 // pred_check
      _
    $region27: #{tpu_custom_call.1} parent=1 // pred_check_branch
      %27 = sbr.rel (0) target = $region29
    $region28: #{tpu_custom_call.1} parent=1 // pred_region
      _
    $region29: #{tpu_custom_call.1} parent=1 // pred_fallthru
      _
    %v28 = vld [vmem:[%s0] sm:$0x3f]
    %v29 = vld [vmem:[%s1] sm:$0xff]
    %v30 = vld [vmem:[%s1 + $0x8] sm:$0xff]
    %v31 = vld [vmem:[%s1 + $0x10] sm:$0xff]
    %v32 = vld [vmem:[%s1 + $0x18] sm:$0xff]
    %v33 = vld [vmem:[%s1 + $0x20] sm:$0xff]
    %v34 = vld [vmem:[%s1 + $0x28] sm:$0xff]
    %v35 = vld [vmem:[%s1 + $0x30] sm:$0xff]
    %v36 = vld [vmem:[%s1 + $0x38] sm:$0xff]
    %38 = vset.pattern.permute.xlu0 0
    %39 = vperm.xlu0 %38, %v29
    %v40 = vpop.permute.xlu0 %39
    %43 = vset.pattern.permute.xlu0 0
    %44 = vperm.xlu0 %43, %v30
    %v45 = vpop.permute.xlu0 %44
    %48 = vset.pattern.permute.xlu0 0
    %49 = vperm.xlu0 %48, %v31
    %v50 = vpop.permute.xlu0 %49
    %53 = vset.pattern.permute.xlu0 0
    %54 = vperm.xlu0 %53, %v32
    %v55 = vpop.permute.xlu0 %54
    %58 = vset.pattern.permute.xlu0 0
    %59 = vperm.xlu0 %58, %v33
    %v60 = vpop.permute.xlu0 %59
    %63 = vset.pattern.permute.xlu0 0
    %64 = vperm.xlu0 %63, %v34
    %v65 = vpop.permute.xlu0 %64
    %68 = vset.pattern.permute.xlu0 0
    %69 = vperm.xlu0 %68, %v35
    %v70 = vpop.permute.xlu0 %69
    %73 = vset.pattern.permute.xlu0 0
    %74 = vperm.xlu0 %73, %v36
    %v75 = vpop.permute.xlu0 %74
    %v77 = vlaneseq
    %v78 = vshrl.u32 %v77, 7
    %v79 = vsub.s32 0, %v78
    %v80 = vrot.slane %v28, %v79
    %v81 = vmul.f32 %v40, %v80
    %v82 = vmul.f32 %v45, %v80
    %v83 = vmul.f32 %v50, %v80
    %v84 = vmul.f32 %v55, %v80
    %v85 = vmul.f32 %v60, %v80
    %v86 = vmul.f32 %v65, %v80
    %v87 = vmul.f32 %v70, %v80
    %v88 = vmul.f32 %v75, %v80
    %89 = vset.pattern.permute.xlu0 1
    %90 = vperm.xlu0 %89, %v29
    %v91 = vpop.permute.xlu0 %90
    %93 = vset.pattern.permute.xlu0 1
    %94 = vperm.xlu0 %93, %v30
    %v95 = vpop.permute.xlu0 %94
    %97 = vset.pattern.permute.xlu0 1
    %98 = vperm.xlu0 %97, %v31
    %v99 = vpop.permute.xlu0 %98
    %101 = vset.pattern.permute.xlu0 1
    %102 = vperm.xlu0 %101, %v32
    %v103 = vpop.permute.xlu0 %102
    %105 = vset.pattern.permute.xlu0 1
    %106 = vperm.xlu0 %105, %v33
    %v107 = vpop.permute.xlu0 %106
    %109 = vset.pattern.permute.xlu0 1
    %110 = vperm.xlu0 %109, %v34
    %v111 = vpop.permute.xlu0 %110
    %113 = vset.pattern.permute.xlu0 1
    %114 = vperm.xlu0 %113, %v35
    %v115 = vpop.permute.xlu0 %114
    %117 = vset.pattern.permute.xlu0 1
    %118 = vperm.xlu0 %117, %v36
    %v119 = vpop.permute.xlu0 %118
    %v121 = vlaneseq
    %v122 = vshrl.u32 %v121, 7
    %v123 = vsub.s32 1, %v122
    %v124 = vrot.slane %v28, %v123
    %v125 = vmul.f32 %v91, %v124
    %v126 = vmul.f32 %v95, %v124
    %v127 = vmul.f32 %v99, %v124
    %v128 = vmul.f32 %v103, %v124
    %v129 = vmul.f32 %v107, %v124
    %v130 = vmul.f32 %v111, %v124
    %v131 = vmul.f32 %v115, %v124
    %v132 = vmul.f32 %v119, %v124
    %v133 = vadd.f32 %v81, %v125
    %v134 = vadd.f32 %v82, %v126
    %v135 = vadd.f32 %v83, %v127
    %v136 = vadd.f32 %v84, %v128
    %v137 = vadd.f32 %v85, %v129
    %v138 = vadd.f32 %v86, %v130
    %v139 = vadd.f32 %v87, %v131
    %v140 = vadd.f32 %v88, %v132
    %141 = vset.pattern.permute.xlu0 2
    %142 = vperm.xlu0 %141, %v29
    %v143 = vpop.permute.xlu0 %142
    %145 = vset.pattern.permute.xlu0 2
    %146 = vperm.xlu0 %145, %v30
    %v147 = vpop.permute.xlu0 %146
    %149 = vset.pattern.permute.xlu0 2
    %150 = vperm.xlu0 %149, %v31
    %v151 = vpop.permute.xlu0 %150
    %153 = vset.pattern.permute.xlu0 2
    %154 = vperm.xlu0 %153, %v32
    %v155 = vpop.permute.xlu0 %154
    %157 = vset.pattern.permute.xlu0 2
    %158 = vperm.xlu0 %157, %v33
    %v159 = vpop.permute.xlu0 %158
    %161 = vset.pattern.permute.xlu0 2
    %162 = vperm.xlu0 %161, %v34
    %v163 = vpop.permute.xlu0 %162
    %165 = vset.pattern.permute.xlu0 2
    %166 = vperm.xlu0 %165, %v35
    %v167 = vpop.permute.xlu0 %166
    %169 = vset.pattern.permute.xlu0 2
    %170 = vperm.xlu0 %169, %v36
    %v171 = vpop.permute.xlu0 %170
    %v173 = vlaneseq
    %v174 = vshrl.u32 %v173, 7
    %v175 = vsub.s32 2, %v174
    %v176 = vrot.slane %v28, %v175
    %v177 = vmul.f32 %v143, %v176
    %v178 = vmul.f32 %v147, %v176
    %v179 = vmul.f32 %v151, %v176
    %v180 = vmul.f32 %v155, %v176
    %v181 = vmul.f32 %v159, %v176
    %v182 = vmul.f32 %v163, %v176
    %v183 = vmul.f32 %v167, %v176
    %v184 = vmul.f32 %v171, %v176
    %v185 = vadd.f32 %v133, %v177
    %v186 = vadd.f32 %v134, %v178
    %v187 = vadd.f32 %v135, %v179
    %v188 = vadd.f32 %v136, %v180
    %v189 = vadd.f32 %v137, %v181
    %v190 = vadd.f32 %v138, %v182
    %v191 = vadd.f32 %v139, %v183
    %v192 = vadd.f32 %v140, %v184
    %193 = vset.pattern.permute.xlu0 3
    %194 = vperm.xlu0 %193, %v29
    %v195 = vpop.permute.xlu0 %194
    %197 = vset.pattern.permute.xlu0 3
    %198 = vperm.xlu0 %197, %v30
    %v199 = vpop.permute.xlu0 %198
    %201 = vset.pattern.permute.xlu0 3
    %202 = vperm.xlu0 %201, %v31
    %v203 = vpop.permute.xlu0 %202
    %205 = vset.pattern.permute.xlu0 3
    %206 = vperm.xlu0 %205, %v32
    %v207 = vpop.permute.xlu0 %206
    %209 = vset.pattern.permute.xlu0 3
    %210 = vperm.xlu0 %209, %v33
    %v211 = vpop.permute.xlu0 %210
    %213 = vset.pattern.permute.xlu0 3
    %214 = vperm.xlu0 %213, %v34
    %v215 = vpop.permute.xlu0 %214
    %217 = vset.pattern.permute.xlu0 3
    %218 = vperm.xlu0 %217, %v35
    %v219 = vpop.permute.xlu0 %218
    %221 = vset.pattern.permute.xlu0 3
    %222 = vperm.xlu0 %221, %v36
    %v223 = vpop.permute.xlu0 %222
    %v225 = vlaneseq
    %v226 = vshrl.u32 %v225, 7
    %v227 = vsub.s32 3, %v226
    %v228 = vrot.slane %v28, %v227
    %v229 = vmul.f32 %v195, %v228
    %v230 = vmul.f32 %v199, %v228
    %v231 = vmul.f32 %v203, %v228
    %v232 = vmul.f32 %v207, %v228
    %v233 = vmul.f32 %v211, %v228
    %v234 = vmul.f32 %v215, %v228
    %v235 = vmul.f32 %v219, %v228
    %v236 = vmul.f32 %v223, %v228
    %v237 = vadd.f32 %v185, %v229
    %v238 = vadd.f32 %v186, %v230
    %v239 = vadd.f32 %v187, %v231
    %v240 = vadd.f32 %v188, %v232
    %v241 = vadd.f32 %v189, %v233
    %v242 = vadd.f32 %v190, %v234
    %v243 = vadd.f32 %v191, %v235
    %v244 = vadd.f32 %v192, %v236
    %245 = vset.pattern.permute.xlu0 4
    %246 = vperm.xlu0 %245, %v29
    %v247 = vpop.permute.xlu0 %246
    %249 = vset.pattern.permute.xlu0 4
    %250 = vperm.xlu0 %249, %v30
    %v251 = vpop.permute.xlu0 %250
    %253 = vset.pattern.permute.xlu0 4
    %254 = vperm.xlu0 %253, %v31
    %v255 = vpop.permute.xlu0 %254
    %257 = vset.pattern.permute.xlu0 4
    %258 = vperm.xlu0 %257, %v32
    %v259 = vpop.permute.xlu0 %258
    %261 = vset.pattern.permute.xlu0 4
    %262 = vperm.xlu0 %261, %v33
    %v263 = vpop.permute.xlu0 %262
    %265 = vset.pattern.permute.xlu0 4
    %266 = vperm.xlu0 %265, %v34
    %v267 = vpop.permute.xlu0 %266
    %269 = vset.pattern.permute.xlu0 4
    %270 = vperm.xlu0 %269, %v35
    %v271 = vpop.permute.xlu0 %270
    %273 = vset.pattern.permute.xlu0 4
    %274 = vperm.xlu0 %273, %v36
    %v275 = vpop.permute.xlu0 %274
    %v277 = vlaneseq
    %v278 = vshrl.u32 %v277, 7
    %v279 = vsub.s32 4, %v278
    %v280 = vrot.slane %v28, %v279
    %v281 = vmul.f32 %v247, %v280
    %v282 = vmul.f32 %v251, %v280
    %v283 = vmul.f32 %v255, %v280
    %v284 = vmul.f32 %v259, %v280
    %v285 = vmul.f32 %v263, %v280
    %v286 = vmul.f32 %v267, %v280
    %v287 = vmul.f32 %v271, %v280
    %v288 = vmul.f32 %v275, %v280
    %v289 = vadd.f32 %v237, %v281
    %v290 = vadd.f32 %v238, %v282
    %v291 = vadd.f32 %v239, %v283
    %v292 = vadd.f32 %v240, %v284
    %v293 = vadd.f32 %v241, %v285
    %v294 = vadd.f32 %v242, %v286
    %v295 = vadd.f32 %v243, %v287
    %v296 = vadd.f32 %v244, %v288
    %297 = vset.pattern.permute.xlu0 5
    %298 = vperm.xlu0 %297, %v29
    %v299 = vpop.permute.xlu0 %298
    %301 = vset.pattern.permute.xlu0 5
    %302 = vperm.xlu0 %301, %v30
    %v303 = vpop.permute.xlu0 %302
    %305 = vset.pattern.permute.xlu0 5
    %306 = vperm.xlu0 %305, %v31
    %v307 = vpop.permute.xlu0 %306
    %309 = vset.pattern.permute.xlu0 5
    %310 = vperm.xlu0 %309, %v32
    %v311 = vpop.permute.xlu0 %310
    %313 = vset.pattern.permute.xlu0 5
    %314 = vperm.xlu0 %313, %v33
    %v315 = vpop.permute.xlu0 %314
    %317 = vset.pattern.permute.xlu0 5
    %318 = vperm.xlu0 %317, %v34
    %v319 = vpop.permute.xlu0 %318
    %321 = vset.pattern.permute.xlu0 5
    %322 = vperm.xlu0 %321, %v35
    %v323 = vpop.permute.xlu0 %322
    %325 = vset.pattern.permute.xlu0 5
    %326 = vperm.xlu0 %325, %v36
    %v327 = vpop.permute.xlu0 %326
    %v329 = vlaneseq
    %v330 = vshrl.u32 %v329, 7
    %v331 = vsub.s32 5, %v330
    %v332 = vrot.slane %v28, %v331
    %v333 = vmul.f32 %v299, %v332
    %v334 = vmul.f32 %v303, %v332
    %v335 = vmul.f32 %v307, %v332
    %v336 = vmul.f32 %v311, %v332
    %v337 = vmul.f32 %v315, %v332
    %v338 = vmul.f32 %v319, %v332
    %v339 = vmul.f32 %v323, %v332
    %v340 = vmul.f32 %v327, %v332
    %v341 = vadd.f32 %v289, %v333
    %v342 = vadd.f32 %v290, %v334
    %v343 = vadd.f32 %v291, %v335
    %v344 = vadd.f32 %v292, %v336
    %v345 = vadd.f32 %v293, %v337
    %v346 = vadd.f32 %v294, %v338
    %v347 = vadd.f32 %v295, %v339
    %v348 = vadd.f32 %v296, %v340
    %v349 = vld [vmem:[%s2] sm:$0xff]
    %v350 = vld [vmem:[%s2 + $0x8] sm:$0xff]
    %v351 = vld [vmem:[%s2 + $0x10] sm:$0xff]
    %v352 = vld [vmem:[%s2 + $0x18] sm:$0xff]
    %v353 = vld [vmem:[%s2 + $0x20] sm:$0xff]
    %v354 = vld [vmem:[%s2 + $0x28] sm:$0xff]
    %v355 = vld [vmem:[%s2 + $0x30] sm:$0xff]
    %v356 = vld [vmem:[%s2 + $0x38] sm:$0xff]
    %358 = vset.pattern.permute.xlu0 0
    %359 = vperm.xlu0 %358, %v349
    %v360 = vpop.permute.xlu0 %359
    %363 = vset.pattern.permute.xlu0 0
    %364 = vperm.xlu0 %363, %v350
    %v365 = vpop.permute.xlu0 %364
    %368 = vset.pattern.permute.xlu0 0
    %369 = vperm.xlu0 %368, %v351
    %v370 = vpop.permute.xlu0 %369
    %373 = vset.pattern.permute.xlu0 0
    %374 = vperm.xlu0 %373, %v352
    %v375 = vpop.permute.xlu0 %374
    %378 = vset.pattern.permute.xlu0 0
    %379 = vperm.xlu0 %378, %v353
    %v380 = vpop.permute.xlu0 %379
    %383 = vset.pattern.permute.xlu0 0
    %384 = vperm.xlu0 %383, %v354
    %v385 = vpop.permute.xlu0 %384
    %388 = vset.pattern.permute.xlu0 0
    %389 = vperm.xlu0 %388, %v355
    %v390 = vpop.permute.xlu0 %389
    %393 = vset.pattern.permute.xlu0 0
    %394 = vperm.xlu0 %393, %v356
    %v395 = vpop.permute.xlu0 %394
    %v397 = vadd.f32 %v341, %v360
    %v398 = vadd.f32 %v342, %v365
    %v399 = vadd.f32 %v343, %v370
    %v400 = vadd.f32 %v344, %v375
    %v401 = vadd.f32 %v345, %v380
    %v402 = vadd.f32 %v346, %v385
    %v403 = vadd.f32 %v347, %v390
    %v404 = vadd.f32 %v348, %v395
    %vm405 = vcmp.gt.f32.partialorder %v397, 0.0
    %vm406 = vcmp.gt.f32.partialorder %v398, 0.0
    %vm407 = vcmp.gt.f32.partialorder %v399, 0.0
    %vm408 = vcmp.gt.f32.partialorder %v400, 0.0
    %vm409 = vcmp.gt.f32.partialorder %v401, 0.0
    %vm410 = vcmp.gt.f32.partialorder %v402, 0.0
    %vm411 = vcmp.gt.f32.partialorder %v403, 0.0
    %vm412 = vcmp.gt.f32.partialorder %v404, 0.0
    %v413 = vmul.f32 %v397, 0.01
    %v414 = vmul.f32 %v398, 0.01
    %v415 = vmul.f32 %v399, 0.01
    %v416 = vmul.f32 %v400, 0.01
    %v417 = vmul.f32 %v401, 0.01
    %v418 = vmul.f32 %v402, 0.01
    %v419 = vmul.f32 %v403, 0.01
    %v420 = vmul.f32 %v404, 0.01
    %v421 = vsel %vm405, %v397, %v413
    %v422 = vsel %vm406, %v398, %v414
    %v423 = vsel %vm407, %v399, %v415
    %v424 = vsel %vm408, %v400, %v416
    %v425 = vsel %vm409, %v401, %v417
    %v426 = vsel %vm410, %v402, %v418
    %v427 = vsel %vm411, %v403, %v419
    %v428 = vsel %vm412, %v404, %v420
    %v429 = vld [vmem:[%s3] sm:$0xff]
    %v430 = vld [vmem:[%s3 + $0x8] sm:$0xff]
    %v431 = vld [vmem:[%s3 + $0x10] sm:$0xff]
    %v432 = vld [vmem:[%s3 + $0x18] sm:$0xff]
    %v433 = vld [vmem:[%s3 + $0x20] sm:$0xff]
    %v434 = vld [vmem:[%s3 + $0x28] sm:$0xff]
    %v435 = vld [vmem:[%s3 + $0x30] sm:$0xff]
    %v436 = vld [vmem:[%s3 + $0x38] sm:$0xff]
    %v437 = vld [vmem:[%s3 + $0x40] sm:$0xff]
    %v438 = vld [vmem:[%s3 + $0x48] sm:$0xff]
    %v439 = vld [vmem:[%s3 + $0x50] sm:$0xff]
    %v440 = vld [vmem:[%s3 + $0x58] sm:$0xff]
    %v441 = vld [vmem:[%s3 + $0x60] sm:$0xff]
    %v442 = vld [vmem:[%s3 + $0x68] sm:$0xff]
    %v443 = vld [vmem:[%s3 + $0x70] sm:$0xff]
    %v444 = vld [vmem:[%s3 + $0x78] sm:$0xff]
    %v445 = vld [vmem:[%s4] sm:$0xff]
    %v446 = vld [vmem:[%s4 + $0x8] sm:$0xff]
    %v447 = vld [vmem:[%s4 + $0x10] sm:$0xff]
    %v448 = vld [vmem:[%s4 + $0x18] sm:$0xff]
    %v449 = vld [vmem:[%s4 + $0x20] sm:$0xff]
    %v450 = vld [vmem:[%s4 + $0x28] sm:$0xff]
    %v451 = vld [vmem:[%s4 + $0x30] sm:$0xff]
    %v452 = vld [vmem:[%s4 + $0x38] sm:$0xff]
    %v453 = vld [vmem:[%s4 + $0x40] sm:$0xff]
    %v454 = vld [vmem:[%s4 + $0x48] sm:$0xff]
    %v455 = vld [vmem:[%s4 + $0x50] sm:$0xff]
    %v456 = vld [vmem:[%s4 + $0x58] sm:$0xff]
    %v457 = vld [vmem:[%s4 + $0x60] sm:$0xff]
    %v458 = vld [vmem:[%s4 + $0x68] sm:$0xff]
    %v459 = vld [vmem:[%s4 + $0x70] sm:$0xff]
    %v460 = vld [vmem:[%s4 + $0x78] sm:$0xff]
    %462 = vset.pattern.permute.xlu0 0
    %463 = vperm.xlu0 %462, %v445
    %v464 = vpop.permute.xlu0 %463
    %467 = vset.pattern.permute.xlu0 0
    %468 = vperm.xlu0 %467, %v446
    %v469 = vpop.permute.xlu0 %468
    %472 = vset.pattern.permute.xlu0 0
    %473 = vperm.xlu0 %472, %v447
    %v474 = vpop.permute.xlu0 %473
    %477 = vset.pattern.permute.xlu0 0
    %478 = vperm.xlu0 %477, %v448
    %v479 = vpop.permute.xlu0 %478
    %482 = vset.pattern.permute.xlu0 0
    %483 = vperm.xlu0 %482, %v449
    %v484 = vpop.permute.xlu0 %483
    %487 = vset.pattern.permute.xlu0 0
    %488 = vperm.xlu0 %487, %v450
    %v489 = vpop.permute.xlu0 %488
    %492 = vset.pattern.permute.xlu0 0
    %493 = vperm.xlu0 %492, %v451
    %v494 = vpop.permute.xlu0 %493
    %497 = vset.pattern.permute.xlu0 0
    %498 = vperm.xlu0 %497, %v452
    %v499 = vpop.permute.xlu0 %498
    %502 = vset.pattern.permute.xlu0 0
    %503 = vperm.xlu0 %502, %v453
    %v504 = vpop.permute.xlu0 %503
    %507 = vset.pattern.permute.xlu0 0
    %508 = vperm.xlu0 %507, %v454
    %v509 = vpop.permute.xlu0 %508
    %512 = vset.pattern.permute.xlu0 0
    %513 = vperm.xlu0 %512, %v455
    %v514 = vpop.permute.xlu0 %513
    %517 = vset.pattern.permute.xlu0 0
    %518 = vperm.xlu0 %517, %v456
    %v519 = vpop.permute.xlu0 %518
    %522 = vset.pattern.permute.xlu0 0
    %523 = vperm.xlu0 %522, %v457
    %v524 = vpop.permute.xlu0 %523
    %527 = vset.pattern.permute.xlu0 0
    %528 = vperm.xlu0 %527, %v458
    %v529 = vpop.permute.xlu0 %528
    %532 = vset.pattern.permute.xlu0 0
    %533 = vperm.xlu0 %532, %v459
    %v534 = vpop.permute.xlu0 %533
    %537 = vset.pattern.permute.xlu0 0
    %538 = vperm.xlu0 %537, %v460
    %v539 = vpop.permute.xlu0 %538
    %vm541 = vcmask 523264
    %v543 = vsel %vm541, %v429, 0
    %v546 = vsel %vm541, %v430, 0
    %v549 = vsel %vm541, %v431, 0
    %v552 = vsel %vm541, %v432, 0
    %v555 = vsel %vm541, %v433, 0
    %v558 = vsel %vm541, %v434, 0
    %v561 = vsel %vm541, %v435, 0
    %v564 = vsel %vm541, %v436, 0
    %v567 = vsel %vm541, %v437, 0
    %v570 = vsel %vm541, %v438, 0
    %v573 = vsel %vm541, %v439, 0
    %v576 = vsel %vm541, %v440, 0
    %v579 = vsel %vm541, %v441, 0
    %v582 = vsel %vm541, %v442, 0
    %v585 = vsel %vm541, %v443, 0
    %v588 = vsel %vm541, %v444, 0
    %590 = vmatprep.subr.mxu0 0.0
    %591 = vmatpush1.msra.mxu0 %v421
    %592 = vmatprep.subr.mxu0 0.0
    %593 = vmatpush1.msra.mxu0 %v422
    %594 = vmatprep.subr.mxu0 0.0
    %595 = vmatpush1.msra.mxu0 %v423
    %596 = vmatprep.subr.mxu0 0.0
    %597 = vmatpush1.msra.mxu0 %v424
    %598 = vmatprep.subr.mxu0 0.0
    %599 = vmatpush1.msra.mxu0 %v425
    %600 = vmatprep.subr.mxu0 0.0
    %601 = vmatpush1.msra.mxu0 %v426
    %602 = vmatprep.subr.mxu0 0.0
    %603 = vmatpush1.msra.mxu0 %v427
    %604 = vmatprep.subr.mxu0 0.0
    %605 = vmatpush1.msra.mxu0 %v428
    %606 = vmatprep.subr.mxu0 0.0
    %607 = vmatpush1.msra.mxu0 0.0
    %608 = vmatprep.subr.mxu0 0.0
    %609 = vmatpush1.msra.mxu0 0.0
    %610 = vmatprep.subr.mxu0 0.0
    %611 = vmatpush1.msra.mxu0 0.0
    %612 = vmatprep.subr.mxu0 0.0
    %613 = vmatpush1.msra.mxu0 0.0
    %614 = vmatprep.subr.mxu0 0.0
    %615 = vmatpush1.msra.mxu0 0.0
    %616 = vmatprep.subr.mxu0 0.0
    %617 = vmatpush1.msra.mxu0 0.0
    %618 = vmatprep.subr.mxu0 0.0
    %619 = vmatpush1.msra.mxu0 0.0
    %620 = vmatprep.subr.mxu0 0.0
    %621 = vmatpush1.msra.mxu0 0.0
    %622 = vmatprep.subr.mxu0 0.0
    %623 = vmatpush1.msra.mxu0 0.0
    %624 = vmatprep.subr.mxu0 0.0
    %625 = vmatpush1.msra.mxu0 0.0
    %626 = vmatprep.subr.mxu0 0.0
    %627 = vmatpush1.msra.mxu0 0.0
    %628 = vmatprep.subr.mxu0 0.0
    %629 = vmatpush1.msra.mxu0 0.0
    %630 = vmatprep.subr.mxu0 0.0
    %631 = vmatpush1.msra.mxu0 0.0
    %632 = vmatprep.subr.mxu0 0.0
    %633 = vmatpush1.msra.mxu0 0.0
    %634 = vmatprep.subr.mxu0 0.0
    %635 = vmatpush1.msra.mxu0 0.0
    %636 = vmatprep.subr.mxu0 0.0
    %637 = vmatpush1.msra.mxu0 0.0
    %638 = vmatprep.subr.mxu0 0.0
    %639 = vmatpush1.msra.mxu0 0.0
    %640 = vmatprep.subr.mxu0 0.0
    %641 = vmatpush1.msra.mxu0 0.0
    %642 = vmatprep.subr.mxu0 0.0
    %643 = vmatpush1.msra.mxu0 0.0
    %644 = vmatprep.subr.mxu0 0.0
    %645 = vmatpush1.msra.mxu0 0.0
    %646 = vmatprep.subr.mxu0 0.0
    %647 = vmatpush1.msra.mxu0 0.0
    %648 = vmatprep.subr.mxu0 0.0
    %649 = vmatpush1.msra.mxu0 0.0
    %650 = vmatprep.subr.mxu0 0.0
    %651 = vmatpush1.msra.mxu0 0.0
    %652 = vmatprep.subr.mxu0 0.0
    %653 = vmatpush1.msra.mxu0 0.0
    %654 = vmatprep.mubr.f32.mxu0 0.0
    %655 = vmatmul.mubr.f32.gmra.mrb[0].mxu0 %v543
    %v656 = vpop.f32.mrb[0].mxu0
    %v657 = vadd.f32 %v464, %v656
    %v658 = vpop.f32.mrb[0].mxu0
    %659 = vmatprep.mubr.f32.mxu0 0.0
    %660 = vmatmul.mubr.f32.gmra.mrb[0].mxu0 %v546
    %v661 = vpop.f32.mrb[0].mxu0
    %v662 = vadd.f32 %v469, %v661
    %v663 = vpop.f32.mrb[0].mxu0
    %664 = vmatprep.mubr.f32.mxu0 0.0
    %665 = vmatmul.mubr.f32.gmra.mrb[0].mxu0 %v549
    %v666 = vpop.f32.mrb[0].mxu0
    %v667 = vadd.f32 %v474, %v666
    %v668 = vpop.f32.mrb[0].mxu0
    %669 = vmatprep.mubr.f32.mxu0 0.0
    %670 = vmatmul.mubr.f32.gmra.mrb[0].mxu0 %v552
    %v671 = vpop.f32.mrb[0].mxu0
    %v672 = vadd.f32 %v479, %v671
    %v673 = vpop.f32.mrb[0].mxu0
    %674 = vmatprep.mubr.f32.mxu0 0.0
    %675 = vmatmul.mubr.f32.gmra.mrb[0].mxu0 %v555
    %v676 = vpop.f32.mrb[0].mxu0
    %v677 = vadd.f32 %v484, %v676
    %v678 = vpop.f32.mrb[0].mxu0
    %679 = vmatprep.mubr.f32.mxu0 0.0
    %680 = vmatmul.mubr.f32.gmra.mrb[0].mxu0 %v558
    %v681 = vpop.f32.mrb[0].mxu0
    %v682 = vadd.f32 %v489, %v681
    %v683 = vpop.f32.mrb[0].mxu0
    %684 = vmatprep.mubr.f32.mxu0 0.0
    %685 = vmatmul.mubr.f32.gmra.mrb[0].mxu0 %v561
    %v686 = vpop.f32.mrb[0].mxu0
    %v687 = vadd.f32 %v494, %v686
    %v688 = vpop.f32.mrb[0].mxu0
    %689 = vmatprep.mubr.f32.mxu0 0.0
    %690 = vmatmul.mubr.f32.gmra.mrb[0].mxu0 %v564
    %v691 = vpop.f32.mrb[0].mxu0
    %v692 = vadd.f32 %v499, %v691
    %v693 = vpop.f32.mrb[0].mxu0
    %694 = vmatprep.mubr.f32.mxu0 0.0
    %695 = vmatmul.mubr.f32.gmra.mrb[0].mxu0 %v567
    %v696 = vpop.f32.mrb[0].mxu0
    %v697 = vadd.f32 %v504, %v696
    %v698 = vpop.f32.mrb[0].mxu0
    %699 = vmatprep.mubr.f32.mxu0 0.0
    %700 = vmatmul.mubr.f32.gmra.mrb[0].mxu0 %v570
    %v701 = vpop.f32.mrb[0].mxu0
    %v702 = vadd.f32 %v509, %v701
    %v703 = vpop.f32.mrb[0].mxu0
    %704 = vmatprep.mubr.f32.mxu0 0.0
    %705 = vmatmul.mubr.f32.gmra.mrb[0].mxu0 %v573
    %v706 = vpop.f32.mrb[0].mxu0
    %v707 = vadd.f32 %v514, %v706
    %v708 = vpop.f32.mrb[0].mxu0
    %709 = vmatprep.mubr.f32.mxu0 0.0
    %710 = vmatmul.mubr.f32.gmra.mrb[0].mxu0 %v576
    %v711 = vpop.f32.mrb[0].mxu0
    %v712 = vadd.f32 %v519, %v711
    %v713 = vpop.f32.mrb[0].mxu0
    %714 = vmatprep.mubr.f32.mxu0 0.0
    %715 = vmatmul.mubr.f32.gmra.mrb[0].mxu0 %v579
    %v716 = vpop.f32.mrb[0].mxu0
    %v717 = vadd.f32 %v524, %v716
    %v718 = vpop.f32.mrb[0].mxu0
    %719 = vmatprep.mubr.f32.mxu0 0.0
    %720 = vmatmul.mubr.f32.gmra.mrb[0].mxu0 %v582
    %v721 = vpop.f32.mrb[0].mxu0
    %v722 = vadd.f32 %v529, %v721
    %v723 = vpop.f32.mrb[0].mxu0
    %724 = vmatprep.mubr.f32.mxu0 0.0
    %725 = vmatmul.mubr.f32.gmra.mrb[0].mxu0 %v585
    %v726 = vpop.f32.mrb[0].mxu0
    %v727 = vadd.f32 %v534, %v726
    %v728 = vpop.f32.mrb[0].mxu0
    %729 = vmatprep.mubr.f32.mxu0 0.0
    %730 = vmatmul.mubr.f32.gmra.mrb[0].mxu0 %v588
    %v731 = vpop.f32.mrb[0].mxu0
    %v732 = vadd.f32 %v539, %v731
    %v733 = vpop.f32.mrb[0].mxu0
    %734 = vdwg.mxu0
    %vm735 = vcmp.gt.f32.partialorder %v657, 0.0
    %vm736 = vcmp.gt.f32.partialorder %v662, 0.0
    %vm737 = vcmp.gt.f32.partialorder %v667, 0.0
    %vm738 = vcmp.gt.f32.partialorder %v672, 0.0
    %vm739 = vcmp.gt.f32.partialorder %v677, 0.0
    %vm740 = vcmp.gt.f32.partialorder %v682, 0.0
    %vm741 = vcmp.gt.f32.partialorder %v687, 0.0
    %vm742 = vcmp.gt.f32.partialorder %v692, 0.0
    %vm743 = vcmp.gt.f32.partialorder %v697, 0.0
    %vm744 = vcmp.gt.f32.partialorder %v702, 0.0
    %vm745 = vcmp.gt.f32.partialorder %v707, 0.0
    %vm746 = vcmp.gt.f32.partialorder %v712, 0.0
    %vm747 = vcmp.gt.f32.partialorder %v717, 0.0
    %vm748 = vcmp.gt.f32.partialorder %v722, 0.0
    %vm749 = vcmp.gt.f32.partialorder %v727, 0.0
    %vm750 = vcmp.gt.f32.partialorder %v732, 0.0
    %v751 = vmul.f32 %v657, 0.01
    %v752 = vmul.f32 %v662, 0.01
    %v753 = vmul.f32 %v667, 0.01
    %v754 = vmul.f32 %v672, 0.01
    %v755 = vmul.f32 %v677, 0.01
    %v756 = vmul.f32 %v682, 0.01
    %v757 = vmul.f32 %v687, 0.01
    %v758 = vmul.f32 %v692, 0.01
    %v759 = vmul.f32 %v697, 0.01
    %v760 = vmul.f32 %v702, 0.01
    %v761 = vmul.f32 %v707, 0.01
    %v762 = vmul.f32 %v712, 0.01
    %v763 = vmul.f32 %v717, 0.01
    %v764 = vmul.f32 %v722, 0.01
    %v765 = vmul.f32 %v727, 0.01
    %v766 = vmul.f32 %v732, 0.01
    %v767 = vsel %vm735, %v657, %v751
    %v768 = vsel %vm736, %v662, %v752
    %v769 = vsel %vm737, %v667, %v753
    %v770 = vsel %vm738, %v672, %v754
    %v771 = vsel %vm739, %v677, %v755
    %v772 = vsel %vm740, %v682, %v756
    %v773 = vsel %vm741, %v687, %v757
    %v774 = vsel %vm742, %v692, %v758
    %v775 = vsel %vm743, %v697, %v759
    %v776 = vsel %vm744, %v702, %v760
    %v777 = vsel %vm745, %v707, %v761
    %v778 = vsel %vm746, %v712, %v762
    %v779 = vsel %vm747, %v717, %v763
    %v780 = vsel %vm748, %v722, %v764
    %v781 = vsel %vm749, %v727, %v765
    %v782 = vsel %vm750, %v732, %v766
    %v783 = vld [vmem:[%s5] sm:$0xff]
    %v784 = vld [vmem:[%s5 + $0x8] sm:$0xff]
    %v785 = vld [vmem:[%s5 + $0x10] sm:$0xff]
    %v786 = vld [vmem:[%s5 + $0x18] sm:$0xff]
    %v787 = vld [vmem:[%s5 + $0x20] sm:$0xff]
    %v788 = vld [vmem:[%s5 + $0x28] sm:$0xff]
    %v789 = vld [vmem:[%s5 + $0x30] sm:$0xff]
    %v790 = vld [vmem:[%s5 + $0x38] sm:$0xff]
    %v791 = vld [vmem:[%s5 + $0x40] sm:$0xff]
    %v792 = vld [vmem:[%s5 + $0x48] sm:$0xff]
    %v793 = vld [vmem:[%s5 + $0x50] sm:$0xff]
    %v794 = vld [vmem:[%s5 + $0x58] sm:$0xff]
    %v795 = vld [vmem:[%s5 + $0x60] sm:$0xff]
    %v796 = vld [vmem:[%s5 + $0x68] sm:$0xff]
    %v797 = vld [vmem:[%s5 + $0x70] sm:$0xff]
    %v798 = vld [vmem:[%s5 + $0x78] sm:$0xff]
    %800 = vset.pattern.permute.xlu0 0
    %801 = vperm.xlu0 %800, %v783
    %v802 = vpop.permute.xlu0 %801
    %805 = vset.pattern.permute.xlu0 0
    %806 = vperm.xlu0 %805, %v784
    %v807 = vpop.permute.xlu0 %806
    %810 = vset.pattern.permute.xlu0 0
    %811 = vperm.xlu0 %810, %v785
    %v812 = vpop.permute.xlu0 %811
    %815 = vset.pattern.permute.xlu0 0
    %816 = vperm.xlu0 %815, %v786
    %v817 = vpop.permute.xlu0 %816
    %820 = vset.pattern.permute.xlu0 0
    %821 = vperm.xlu0 %820, %v787
    %v822 = vpop.permute.xlu0 %821
    %825 = vset.pattern.permute.xlu0 0
    %826 = vperm.xlu0 %825, %v788
    %v827 = vpop.permute.xlu0 %826
    %830 = vset.pattern.permute.xlu0 0
    %831 = vperm.xlu0 %830, %v789
    %v832 = vpop.permute.xlu0 %831
    %835 = vset.pattern.permute.xlu0 0
    %836 = vperm.xlu0 %835, %v790
    %v837 = vpop.permute.xlu0 %836
    %840 = vset.pattern.permute.xlu0 0
    %841 = vperm.xlu0 %840, %v791
    %v842 = vpop.permute.xlu0 %841
    %845 = vset.pattern.permute.xlu0 0
    %846 = vperm.xlu0 %845, %v792
    %v847 = vpop.permute.xlu0 %846
    %850 = vset.pattern.permute.xlu0 0
    %851 = vperm.xlu0 %850, %v793
    %v852 = vpop.permute.xlu0 %851
    %855 = vset.pattern.permute.xlu0 0
    %856 = vperm.xlu0 %855, %v794
    %v857 = vpop.permute.xlu0 %856
    %860 = vset.pattern.permute.xlu0 0
    %861 = vperm.xlu0 %860, %v795
    %v862 = vpop.permute.xlu0 %861
    %865 = vset.pattern.permute.xlu0 0
    %866 = vperm.xlu0 %865, %v796
    %v867 = vpop.permute.xlu0 %866
    %870 = vset.pattern.permute.xlu0 0
    %871 = vperm.xlu0 %870, %v797
    %v872 = vpop.permute.xlu0 %871
    %875 = vset.pattern.permute.xlu0 0
    %876 = vperm.xlu0 %875, %v798
    %v877 = vpop.permute.xlu0 %876
    %v879 = vmul.f32 %v802, %v767
    %v880 = vmul.f32 %v807, %v768
    %v881 = vmul.f32 %v812, %v769
    %v882 = vmul.f32 %v817, %v770
    %v883 = vmul.f32 %v822, %v771
    %v884 = vmul.f32 %v827, %v772
    %v885 = vmul.f32 %v832, %v773
    %v886 = vmul.f32 %v837, %v774
    %v887 = vmul.f32 %v842, %v775
    %v888 = vmul.f32 %v847, %v776
    %v889 = vmul.f32 %v852, %v777
    %v890 = vmul.f32 %v857, %v778
    %v891 = vmul.f32 %v862, %v779
    %v892 = vmul.f32 %v867, %v780
    %v893 = vmul.f32 %v872, %v781
    %v894 = vmul.f32 %v877, %v782
    %v895 = vadd.f32 %v879, %v880
    %v896 = vadd.f32 %v895, %v881
    %v897 = vadd.f32 %v896, %v882
    %v898 = vadd.f32 %v897, %v883
    %v899 = vadd.f32 %v898, %v884
    %v900 = vadd.f32 %v899, %v885
    %v901 = vadd.f32 %v900, %v886
    %v902 = vadd.f32 %v901, %v887
    %v903 = vadd.f32 %v902, %v888
    %v904 = vadd.f32 %v903, %v889
    %v905 = vadd.f32 %v904, %v890
    %v906 = vadd.f32 %v905, %v891
    %v907 = vadd.f32 %v906, %v892
    %v908 = vadd.f32 %v907, %v893
    %v909 = vadd.f32 %v908, %v894
    %v910 = vrot.slane %v909, 4
    %v911 = vadd.f32 %v909, %v910
    %v912 = vrot.slane %v911, 2
    %v913 = vadd.f32 %v911, %v912
    %v914 = vrot.slane %v913, 1
    %v915 = vadd.f32 %v913, %v914
    %s916 = sld [smem:[#allocation2]]
    %v917 = vstv %s916
    %v918 = vadd.f32 %v915, %v917
    %919 = vst [vmem:[#allocation3] sm:$0x1] %v918
    // Predicated region
    $region30: #{tpu_custom_call.1} parent=1 // pred_check
      _
    $region31: #{tpu_custom_call.1} parent=1 // pred_check_branch
      %921 = sbr.rel (0) target = $region33
    $region32: #{tpu_custom_call.1} parent=1 // pred_region
      %s923 = ssub.s32 16, 16
      %924 = vsyncadd [#allocation4], %s923
      %s926 = sshll.u32 [#allocation3], 4
      %s927 = int_to_ptr.vmem [resolvable:$true] %s926
      %929 = dma.vmem_to_hbm [thread:$0]  %s927, 16, %s7, [#allocation4]
    $region33: #{tpu_custom_call.1} parent=1 // pred_fallthru
      _
    // Predicated region
    $region34: #{tpu_custom_call.1} parent=1 // pred_check
      _
    $region35: #{tpu_custom_call.1} parent=1 // pred_check_branch
      %931 = sbr.rel (0) target = $region37
    $region36: #{tpu_custom_call.1} parent=1 // pred_region
      %932 = dma.done [#allocation4], 16
    $region37: #{tpu_custom_call.1} parent=1 // pred_fallthru
      _
    %933 = vsyncpa [#allocation4], 1

</llo_original>
